<compile_context>
chip_gen: v7x
topology: tpu7x:2x2x1
jax: 0.10.0
libtpu: 0.0.40
codegen_flags: <defaults>
</compile_context>

<pallas_src>
import functools
import math

import jax
import jax.numpy as jnp
from jax import lax
from jax.experimental import pallas as pl
from jax.experimental.pallas import tpu as pltpu

BN_EPS = 1e-5
BN_SCALE = 1.0 / math.sqrt(1.0 + BN_EPS)
# TODO(synk): common.DEPTH_RANGE is not part of the provided source; handtailor uses 3.0.
DEPTH_RANGE = 3.0

_LANE = 128
_VMEM_LIMIT = 32 * 1024 * 1024


def _round_up(x, m):
    return ((x + m - 1) // m) * m


def _activation(y, act):
    if act == "relu":
        return jnp.maximum(y, 0.0)
    if act == "sigmoid":
        # exp and the approximate reciprocal both issue on the (otherwise idle) EUP slot.
        return pl.reciprocal(1.0 + jnp.exp(-y), approx=True)
    return y


# ----------------------------------------------------------------------------
# Fused matmul kernel:  out = act(((X @ W) [+ R]) * scale + shift_eff)
#   W, scale/shift are pre-padded & resident (index_map constant -> DMA'd once).
# ----------------------------------------------------------------------------
def _make_matmul_kernel(act, has_res):
    def kernel(x_ref, w_ref, ss_ref, *rest):
        if has_res:
            r_ref, o_ref = rest
        else:
            (o_ref,) = rest
        acc = jnp.dot(x_ref[...], w_ref[...], preferred_element_type=jnp.float32)
        if has_res:
            acc = acc + r_ref[...].astype(jnp.float32)
        ss = ss_ref[...]                       # (2, Np) f32: row0=scale, row1=shift_eff
        y = acc * ss[0:1, :] + ss[1:2, :]
        y = _activation(y, act)
        o_ref[...] = y.astype(o_ref.dtype)

    return kernel


def _fused_matmul_impl(x, w, ss, res, act, out_dtype):
    if w.ndim == 3:                            # (9, Cinp, Np) -> (9*Cinp, Np), free inside jit
        w = w.reshape(-1, w.shape[-1])
    M, K = x.shape
    Kp, Np = w.shape

    TM = 128 if M >= 128 else _round_up(M, 16)
    Mp = _round_up(M, TM)

    xb = x.astype(jnp.bfloat16)
    if Mp != M or Kp != K:
        xb = jnp.pad(xb, ((0, Mp - M), (0, Kp - K)))

    has_res = res is not None
    args = [xb, w.astype(jnp.bfloat16), ss]
    in_specs = [
        pl.BlockSpec((TM, Kp), lambda i: (i, 0)),
        pl.BlockSpec((Kp, Np), lambda i: (0, 0)),   # full weight resident in VMEM
        pl.BlockSpec((2, Np), lambda i: (0, 0)),
    ]
    if has_res:
        rb = res.astype(jnp.bfloat16)
        if Mp != M:
            rb = jnp.pad(rb, ((0, Mp - M), (0, 0)))
        args.append(rb)
        in_specs.append(pl.BlockSpec((TM, Np), lambda i: (i, 0)))

    out = pl.pallas_call(
        _make_matmul_kernel(act, has_res),
        out_shape=jax.ShapeDtypeStruct((Mp, Np), out_dtype),
        grid=(Mp // TM,),
        in_specs=in_specs,
        out_specs=pl.BlockSpec((TM, Np), lambda i: (i, 0)),
        compiler_params=pltpu.CompilerParams(
            dimension_semantics=("parallel",),
            vmem_limit_bytes=_VMEM_LIMIT),
    )(*args)
    if Mp != M:
        out = out[:M]
    return out


@functools.partial(jax.jit, static_argnames=("act", "out_dtype"))
def _matmul_nores(x, w, ss, *, act, out_dtype):
    return _fused_matmul_impl(x, w, ss, None, act, out_dtype)


@functools.partial(jax.jit, static_argnames=("act", "out_dtype"))
def _matmul_res(x, w, ss, res, *, act, out_dtype):
    return _fused_matmul_impl(x, w, ss, res, act, out_dtype)


def fused_matmul(x, w, ss, res=None, act="none", out_dtype=jnp.bfloat16):
    if res is None:
        return _matmul_nores(x, w, ss, act=act, out_dtype=out_dtype)
    return _matmul_res(x, w, ss, res, act=act, out_dtype=out_dtype)


# ----------------------------------------------------------------------------
# Direct 3x3 stride-1 pad-1 conv kernel: no HBM im2col; 9-tap reduction in-kernel.
#   x (padded NHWC) resident per image, weight (9, Cinp, Np) fully resident.
# ----------------------------------------------------------------------------
def _make_conv3_kernel(act, TH, Wo, Cp, Np):
    def kernel(x_ref, w_ref, ss_ref, o_ref):
        h0 = pl.program_id(1) * TH
        acc = jnp.zeros((TH * Wo, Np), jnp.float32)
        for dy in range(3):
            for dx in range(3):
                win = x_ref[:, pl.ds(h0 + dy, TH), pl.ds(dx, Wo), :]   # (1,TH,Wo,Cp)
                patch = win.reshape(TH * Wo, Cp)
                acc = acc + jnp.dot(patch, w_ref[dy * 3 + dx],
                                    preferred_element_type=jnp.float32)
        ss = ss_ref[...]
        y = acc * ss[0:1, :] + ss[1:2, :]
        y = _activation(y, act)
        o_ref[...] = y.reshape(1, TH, Wo, Np).astype(o_ref.dtype)

    return kernel


@functools.partial(jax.jit, static_argnames=("act",))
def _conv3x3_jit(x, w, ss, *, act):
    N, H, W, Cp = x.shape
    Np_ = w.shape[-1]
    xp = jnp.pad(x.astype(jnp.bfloat16), ((0, 0), (1, 1), (1, 1), (0, 0)))
    TH = min(H, max(1, 256 // W))
    while H % TH:
        TH -= 1
    grid = (N, H // TH)
    return pl.pallas_call(
        _make_conv3_kernel(act, TH, W, Cp, Np_),
        out_shape=jax.ShapeDtypeStruct((N, H, W, Np_), jnp.bfloat16),
        grid=grid,
        in_specs=[
            pl.BlockSpec((1, H + 2, W + 2, Cp), lambda n, h: (n, 0, 0, 0)),
            pl.BlockSpec((9, Cp, Np_), lambda n, h: (0, 0, 0)),
            pl.BlockSpec((2, Np_), lambda n, h: (0, 0)),
        ],
        out_specs=pl.BlockSpec((1, TH, W, Np_), lambda n, h: (n, h, 0, 0)),
        compiler_params=pltpu.CompilerParams(
            dimension_semantics=("parallel", "parallel"),
            vmem_limit_bytes=_VMEM_LIMIT),
    )(xp, w.astype(jnp.bfloat16), ss)


# ----------------------------------------------------------------------------
# Conv dispatch + glue ops (plain JAX for pooling / upsampling)
# ----------------------------------------------------------------------------
def apply_conv(conv, x, act="none", residual=None):
    """x: NHWC (channels already padded to the conv's expected K layout)."""
    N, H, W, _ = x.shape
    k, s, p = conv["k"], conv["s"], conv["p"]
    if k == 3 and s == 1 and p == 1 and W % 8 == 0 and residual is None:
        return _conv3x3_jit(x, conv["w"], conv["ss"], act=act)
    if k == 1:
        patches = x
        Ho, Wo = H, W
    else:
        # im2col fallback: only the single 7x7 stem and tiny (<=4x4) 3x3 layers hit this.
        xpad = jnp.pad(x, ((0, 0), (p, p), (p, p), (0, 0)))
        Ho = (H + 2 * p - k) // s + 1
        Wo = (W + 2 * p - k) // s + 1
        cols = [xpad[:, dy:dy + (Ho - 1) * s + 1:s, dx:dx + (Wo - 1) * s + 1:s, :]
                for dy in range(k) for dx in range(k)]
        patches = jnp.concatenate(cols, axis=-1)
    xm = patches.reshape(N * Ho * Wo, -1)
    rm = None if residual is None else residual.reshape(N * Ho * Wo, -1)
    y = fused_matmul(xm, conv["w"], conv["ss"], res=rm, act=act,
                     out_dtype=jnp.bfloat16)
    return y.reshape(N, Ho, Wo, y.shape[-1])


def max_pool(x, k, s, p):
    init = jnp.array(-jnp.inf, dtype=x.dtype)
    return lax.reduce_window(
        x, init, lax.max,
        window_dimensions=(1, k, k, 1),
        window_strides=(1, s, s, 1),
        padding=((0, 0), (p, p), (p, p), (0, 0)))


def upsample2x(x):  # F.interpolate(scale_factor=2), default nearest
    return jnp.repeat(jnp.repeat(x, 2, axis=1), 2, axis=2)


# ----------------------------------------------------------------------------
# Deterministic parameter construction (pre-padded, BN + bias folded once)
# ----------------------------------------------------------------------------
class ParamGen:
    def __init__(self, seed):
        self._key = jax.random.PRNGKey(seed)
        self._i = 0

    def take(self, shape, std):
        self._i += 1
        k = jax.random.fold_in(self._key, self._i)
        return std * jax.random.normal(k, shape, dtype=jnp.float32)


def _make_ss(cout, np_, bias, bn):
    scale_v = BN_SCALE if bn else 1.0
    ss = jnp.zeros((2, np_), jnp.float32)
    ss = ss.at[0, :cout].set(scale_v)
    ss = ss.at[1, :cout].set(bias * scale_v)   # shift_eff = b*scale + beta (beta=0)
    return ss


def make_conv(pg, cin, cout, k, s=1, p=0, bn=False):
    # TODO(synk): real PyTorch weights (cout,cin,kh,kw) would need a transpose at load time.
    fan_in = k * k * cin
    std = 1.0 / math.sqrt(fan_in)
    np_ = _round_up(cout, _LANE)
    if k == 3 and s == 1 and p == 1:
        cinp = _round_up(cin, _LANE)
        w = jnp.zeros((9, cinp, np_), jnp.float32)
        w = w.at[:, :cin, :cout].set(pg.take((9, cin, cout), std))
    else:
        kp = _round_up(fan_in, _LANE)
        w = jnp.zeros((kp, np_), jnp.float32)          # rows ordered (dy, dx, cin)
        w = w.at[:fan_in, :cout].set(pg.take((fan_in, cout), std))
    bias = jnp.zeros((cout,), jnp.float32)
    return dict(w=w.astype(jnp.bfloat16), ss=_make_ss(cout, np_, bias, bn),
                k=k, s=s, p=p, cout=cout)


def make_linear(pg, cin, cout, bn=False):
    std = 1.0 / math.sqrt(cin)
    kp, np_ = _round_up(cin, _LANE), _round_up(cout, _LANE)
    w = jnp.zeros((kp, np_), jnp.float32)
    w = w.at[:cin, :cout].set(pg.take((cin, cout), std))
    bias = jnp.zeros((cout,), jnp.float32)
    return dict(w=w.astype(jnp.bfloat16), ss=_make_ss(cout, np_, bias, bn), cout=cout)


# -------------------------- BottleneckBlock ---------------------------------
def make_bottleneck(pg, cin, cout):
    mid = cout // 2 if cout >= cin else cin // 2
    return dict(
        conv1=make_conv(pg, cin, mid, 1, bn=True),
        conv2=make_conv(pg, mid, mid, 3, 1, 1, bn=True),
        conv3=make_conv(pg, mid, cout, 1, bn=True),
        conv4=(make_conv(pg, cin, cout, 1) if cin != cout else None))


def apply_bottleneck(blk, x):
    out = apply_conv(blk["conv1"], x, act="relu")
    out = apply_conv(blk["conv2"], out, act="relu")
    residual = x if blk["conv4"] is None else apply_conv(blk["conv4"], x)
    # PyTorch: out = relu(bn3(conv3(out) + residual)) -> residual enters before BN3.
    out = apply_conv(blk["conv3"], out, act="relu", residual=residual)
    return out


def apply_seq(blocks, x):
    for b in blocks:
        x = apply_bottleneck(b, x)
    return x


# ------------------------------ Hourglass -----------------------------------
def make_hourglass(pg, ch, depth=4, nblocks=1):
    hg = []
    for i in range(depth):
        res = [[make_bottleneck(pg, ch, ch) for _ in range(nblocks)]
               for _ in range(3)]
        if i == 0:
            res.append([make_bottleneck(pg, ch, ch) for _ in range(nblocks)])
        hg.append(res)
    return hg


def apply_hourglass(hg, n, x):
    up1 = apply_seq(hg[n - 1][0], x)
    low1 = max_pool(x, 2, 2, 0)
    low1 = apply_seq(hg[n - 1][1], low1)
    if n > 1:
        low2 = apply_hourglass(hg, n - 1, low1)
    else:
        low2 = apply_seq(hg[n - 1][3], low1)
    low3 = apply_seq(hg[n - 1][2], low2)
    up2 = upsample2x(low3)
    return up1 + up2


# -------------------------------- Hand2D ------------------------------------
def make_hand2d(pg, nstacks=2, njoints=21):
    ch = 256
    return dict(
        conv1=make_conv(pg, 3, 64, 7, 2, 3, bn=True),
        layer1=[make_bottleneck(pg, 64, 128)],
        layer2=[make_bottleneck(pg, 128, 256)],
        layer3=[make_bottleneck(pg, 256, 256)],
        hg=[make_hourglass(pg, ch) for _ in range(nstacks)],
        res=[[make_bottleneck(pg, ch, ch)] for _ in range(nstacks)],
        hm=[make_conv(pg, ch, njoints, 1) for _ in range(nstacks)],
        fc=[make_conv(pg, ch + njoints, ch, 1, bn=True) for _ in range(nstacks)],
        nstacks=nstacks)


def apply_hand2d(p, x):
    net = apply_conv(p["conv1"], x, act="relu")
    net = apply_seq(p["layer1"], net)
    net = max_pool(net, 2, 2, 0)
    net = apply_seq(p["layer2"], net)
    net = apply_seq(p["layer3"], net)
    l_hm, l_enc = [], []
    for i in range(p["nstacks"]):
        net = apply_hourglass(p["hg"][i], 4, net)
        net = apply_seq(p["res"][i], net)
        est_hm = apply_conv(p["hm"][i], net, act="sigmoid")
        net = jnp.concatenate([net, est_hm], axis=-1)
        net = apply_conv(p["fc"][i], net, act="relu")
        l_hm.append(est_hm)
        l_enc.append(net)
    return l_hm, l_enc


# ------------------------------ Hand2Dto3D -----------------------------------
def make_hand2dto3d(pg, nstacks=2, njoints=21):
    ch = 256
    return dict(
        hg=[make_hourglass(pg, ch) for _ in range(nstacks)],
        res=[[make_bottleneck(pg, ch, ch)] for _ in range(nstacks)],
        fc=[make_conv(pg, ch + 2 * njoints, ch, 1, bn=True) for _ in range(nstacks)],
        hm3d=[make_conv(pg, ch, 2 * njoints, 1) for _ in range(nstacks)],
        nstacks=nstacks)


def apply_hand2dto3d(p, enc):
    net = enc
    l_hm3d, l_enc3d = [], []
    for i in range(p["nstacks"]):
        net = apply_hourglass(p["hg"][i], 4, net)
        net = apply_seq(p["res"][i], net)
        hm3d = apply_conv(p["hm3d"][i], net, act="sigmoid")
        net = jnp.concatenate([net, hm3d], axis=-1)
        net = apply_conv(p["fc"][i], net, act="relu")
        l_hm3d.append(hm3d)
        l_enc3d.append(net)
    return l_hm3d, l_enc3d


# ------------------------------- ResNet18 ------------------------------------
def make_resnet18(pg):
    def layer(cin, cout):
        return [make_bottleneck(pg, cin, cout), make_bottleneck(pg, cout, cout)]
    return dict(layer1=layer(256, 512), layer2=layer(512, 512),
                layer3=layer(512, 512), layer4=layer(512, 512))


def apply_resnet18(p, x):
    x = max_pool(x, 3, 2, 1)
    x = apply_seq(p["layer1"], x)
    x = max_pool(x, 3, 2, 1)
    x = apply_seq(p["layer2"], x)
    x = max_pool(x, 3, 2, 1)
    x = apply_seq(p["layer3"], x)
    x = max_pool(x, 3, 2, 1)
    x = apply_seq(p["layer4"], x)
    return jnp.mean(x.astype(jnp.float32), axis=(1, 2))  # AdaptiveAvgPool2d + flatten


# ----------------------------- MLP (Linear+BN+ReLU) --------------------------
def make_mlp(pg, in_dim, hidden, out_dim):
    layers, prev = [], in_dim
    for h in hidden:
        layers.append(dict(lin=make_linear(pg, prev, h, bn=True), act="relu"))
        prev = h
    layers.append(dict(lin=make_linear(pg, prev, out_dim, bn=False), act="none"))
    return layers


def apply_mlp(layers, x):
    for L in layers:
        x = fused_matmul(x, L["lin"]["w"], L["lin"]["ss"], act=L["act"],
                         out_dtype=jnp.float32)
    return x[:, :layers[-1]["lin"]["cout"]]


# ------------------------- handtailor utils (plain JAX) ----------------------
# TODO(synk): utils.hm_to_uvd / quaternion helpers are not in the provided source;
#             reimplemented following the handtailor / kornia conventions.
def hm_to_uvd(hm3d):  # hm3d: (B, H, W, 2*nj) NHWC f32
    B, H, W, C = hm3d.shape
    nj = C // 2
    hm2d = hm3d[..., :nj].reshape(B, H * W, nj)
    depth = hm3d[..., nj:].reshape(B, H * W, nj)
    hm_norm = hm2d / jnp.sum(hm2d, axis=1, keepdims=True)
    grid_y = jnp.repeat(jnp.arange(H, dtype=jnp.float32), W)
    grid_x = jnp.tile(jnp.arange(W, dtype=jnp.float32), H)
    u = jnp.sum(grid_x[None, :, None] * hm_norm, axis=1)
    v = jnp.sum(grid_y[None, :, None] * hm_norm, axis=1)
    uv = jnp.stack([u, v], axis=-1) / W
    d = jnp.sum(depth * hm_norm, axis=1)[..., None]
    return jnp.concatenate([uv, d], axis=-1)  # (B, nj, 3)


def normalize_quaternion(q, eps=1e-12):
    norm = jnp.sqrt(jnp.sum(q * q, axis=-1, keepdims=True))
    return q / jnp.maximum(norm, eps)


def quaternion_to_angle_axis(q):
    q1, q2, q3 = q[..., 1], q[..., 2], q[..., 3]
    sin_sq = q1 * q1 + q2 * q2 + q3 * q3
    sin_t = jnp.sqrt(sin_sq)
    cos_t = q[..., 0]
    two_theta = 2.0 * jnp.where(cos_t < 0.0,
                                jnp.arctan2(-sin_t, -cos_t),
                                jnp.arctan2(sin_t, cos_t))
    k_pos = two_theta / jnp.where(sin_t == 0.0, 1.0, sin_t)
    k = jnp.where(sin_sq > 0.0, k_pos, 2.0)
    return jnp.stack([q1 * k, q2 * k, q3 * k], axis=-1)


# ------------------------------ HandNetInTheWild ------------------------------
def make_handnet(seed=1234, njoints=21):
    pg = ParamGen(seed)
    return dict(
        hand2d=make_hand2d(pg, njoints=njoints),
        hand2dto3d=make_hand2dto3d(pg, njoints=njoints),
        decoder=make_resnet18(pg),
        shapereg=make_mlp(pg, 512, [512, 512, 1024, 1024, 512, 256], 12),
        iknet=make_mlp(pg, 3 * njoints, [256, 512, 1024, 1024, 512, 256], 64),
        njoints=njoints)


def apply_iknet(layers, joint):
    B = joint.shape[0]
    x = joint.reshape(B, -1).astype(jnp.float32)
    quat = apply_mlp(layers, x).reshape(B, 16, 4)
    quat = normalize_quaternion(quat)
    so3 = quaternion_to_angle_axis(quat).reshape(B, 48)
    return so3, quat


def handnet_forward(params, x_nchw):
    nj = params["njoints"]
    x = jnp.transpose(x_nchw, (0, 2, 3, 1)).astype(jnp.bfloat16)  # NCHW -> NHWC

    # Hand3D: Hand2D -> Hand2Dto3D
    hm_list, enc = apply_hand2d(params["hand2d"], x)
    hm3d_list, enc3d = apply_hand2dto3d(params["hand2dto3d"], enc[-1])
    hm3d_last = hm3d_list[-1][..., :2 * nj].astype(jnp.float32)
    uvd = hm_to_uvd(hm3d_last)
    hm_last = hm3d_last[..., :nj]                       # (B,16,16,21)

    # decoder + shape regression
    feat = apply_resnet18(params["decoder"], enc3d[-1])
    shape_vector = apply_mlp(params["shapereg"], feat)
    beta = shape_vector[:, 2:]

    # joint normalization (matches the PyTorch forward)
    joint = uvd
    joint = joint.at[:, :, 2].multiply(DEPTH_RANGE)
    deltaj = joint[:, 0, :] - joint[:, 9, :]
    s = jnp.sqrt((deltaj[0, 0] ** 2 + deltaj[0, 1] ** 2) /
                 (1.0 - deltaj[0, 2] ** 2))
    joint = joint.at[:, :, :2].divide(s)
    joint_root = joint[:, 9:10, :]                      # (B,1,3)
    joint_ = joint - joint_root
    diff = joint_[:, 0, :] - joint_[:, 9, :]            # ref_bone_link = (0, 9)
    bone_pred = jnp.sqrt(jnp.sum(diff * diff, axis=1, keepdims=True))[:, None, :]
    bone_vis = bone_pred
    _joint_ = joint_ / bone_pred

    so3, _ = apply_iknet(params["iknet"], _joint_)

    hm_out = jnp.transpose(hm_last, (0, 3, 1, 2))       # back to NCHW
    return hm_out, so3, beta, joint_root, bone_vis / 2


# ----------------------------------- main -------------------------------------
if __name__ == "__main__":
    params = make_handnet(seed=1234)
    key = jax.random.PRNGKey(0)
    # Minimum spatial size for hourglass depth=4 after the /4 stem is 64x64.
    x = jax.random.normal(key, (2, 3, 64, 64), dtype=jnp.float32)

    outs = handnet_forward(params, x)
    outs = jax.block_until_ready(outs)

    hm_last, so3, beta, joint_root, bone_half = outs
    assert hm_last.shape == (2, 21, 16, 16)
    assert so3.shape == (2, 48)
    assert beta.shape == (2, 10)
    assert joint_root.shape == (2, 1, 3)
    assert bone_half.shape == (2, 1, 1)
    print("KERNEL_OK")
</pallas_src>

<mosaic_0001>
module attributes {stable_mosaic.version = 11 : i64} {
  func.func @kernel(%arg0: i32, %arg1: memref<128x256xbf16, #tpu.memory_space<vmem>>, %arg2: memref<256x128xbf16, #tpu.memory_space<vmem>>, %arg3: memref<2x128xf32, #tpu.memory_space<vmem>>, %arg4: memref<128x128xbf16, #tpu.memory_space<vmem>>) attributes {dimension_semantics = [#tpu.dimension_semantics<parallel>], iteration_bounds = array<i64: 16>, scalar_prefetch = 0 : i64, scratch_operands = 0 : i64, tpu.core_type = #tpu.core_type<tc>, window_params = [{transform_indices = @transform_0, window_bounds = array<i64: 128, 256>}, {pipeline_mode = #tpu.pipeline_mode<synchronous>, transform_indices = @transform_1, window_bounds = array<i64: 256, 128>}, {pipeline_mode = #tpu.pipeline_mode<synchronous>, transform_indices = @transform_2, window_bounds = array<i64: 2, 128>}, {transform_indices = @transform_3, window_bounds = array<i64: 128, 128>}]} {
    %c0 = arith.constant 0 : index
    %c0_0 = arith.constant 0 : index
    %0 = vector.load %arg1[%c0, %c0_0] : memref<128x256xbf16, #tpu.memory_space<vmem>>, vector<128x256xbf16>
    %c0_1 = arith.constant 0 : index
    %c0_2 = arith.constant 0 : index
    %1 = vector.load %arg2[%c0_1, %c0_2] : memref<256x128xbf16, #tpu.memory_space<vmem>>, vector<256x128xbf16>
    %cst = arith.constant dense<0.000000e+00> : vector<128x128xf32>
    %2 = tpu.matmul %0, %1, %cst {dimension_numbers = #tpu.dot_dimension_numbers<[1], [0], [0], [1], [0, 0, 1, 1], [], []>} : vector<128x256xbf16>, vector<256x128xbf16>, vector<128x128xf32> -> vector<128x128xf32>
    %c0_3 = arith.constant 0 : index
    %c0_4 = arith.constant 0 : index
    %3 = vector.load %arg3[%c0_3, %c0_4] : memref<2x128xf32, #tpu.memory_space<vmem>>, vector<2x128xf32>
    %4 = vector.extract_strided_slice %3 {offsets = [0, 0], sizes = [1, 128], strides = [1, 1]} : vector<2x128xf32> to vector<1x128xf32>
    %5 = vector.broadcast %4 : vector<1x128xf32> to vector<128x128xf32>
    %6 = arith.mulf %2, %5 : vector<128x128xf32>
    %7 = vector.extract_strided_slice %3 {offsets = [1, 0], sizes = [1, 128], strides = [1, 1]} : vector<2x128xf32> to vector<1x128xf32>
    %8 = vector.broadcast %7 : vector<1x128xf32> to vector<128x128xf32>
    %9 = arith.addf %6, %8 : vector<128x128xf32>
    %cst_5 = arith.constant 0.000000e+00 : f32
    %10 = vector.broadcast %cst_5 : f32 to vector<128x128xf32>
    %11 = arith.maximumf %9, %10 : vector<128x128xf32>
    %12 = arith.truncf %11 : vector<128x128xf32> to vector<128x128xbf16>
    %c0_6 = arith.constant 0 : index
    %c0_7 = arith.constant 0 : index
    %13 = vector.load %arg4[%c0_6, %c0_7] : memref<128x128xbf16, #tpu.memory_space<vmem>>, vector<128x128xbf16>
    tpu.vector_store %arg4[%c0_6, %c0_7], %12 {strides = array<i32>} : memref<128x128xbf16, #tpu.memory_space<vmem>>, vector<128x128xbf16>,
    return
  }
  func.func @transform_0(%arg0: i32) -> (i32, i32) {
    %c0_i32 = arith.constant 0 : i32
    %c0_i32_0 = arith.constant 0 : i32
    return %arg0, %c0_i32 : i32, i32
  }
  func.func @transform_1(%arg0: i32) -> (i32, i32) {
    %c0_i32 = arith.constant 0 : i32
    %c0_i32_0 = arith.constant 0 : i32
    %c0_i32_1 = arith.constant 0 : i32
    return %c0_i32, %c0_i32_0 : i32, i32
  }
  func.func @transform_2(%arg0: i32) -> (i32, i32) {
    %c0_i32 = arith.constant 0 : i32
    %c0_i32_0 = arith.constant 0 : i32
    %c0_i32_1 = arith.constant 0 : i32
    return %c0_i32, %c0_i32_0 : i32, i32
  }
  func.func @transform_3(%arg0: i32) -> (i32, i32) {
    %c0_i32 = arith.constant 0 : i32
    %c0_i32_0 = arith.constant 0 : i32
    return %arg0, %c0_i32 : i32, i32
  }
}

</mosaic_0001>

<llo_original>
// kernel: _matmul_nores.1
$region0: #{_matmul_nores.1}
  #allocation0 [shape = 'u32[]', space=smem, size = 0x4, offset = 0x4, fixed_abs, tag = 'smem constant byte address 0x4 - core index']
  #allocation1 [shape = 'u32[144,128]{1,0:T(1,128)}', space=vmem, size = 0x12000, scoped, tag = 'internal scratch']
  %s0 = inlined_call_operand.vmem [shape: bf16[2048,256], index: 0, kind: input, shape index: {}]
  %s1 = inlined_call_operand.vmem [shape: bf16[256,128], index: 1, kind: input, shape index: {}]
  %s2 = inlined_call_operand.vmem [shape: f32[2,128], index: 2, kind: input, shape index: {}]
  %s3 = inlined_call_operand.hbm [shape: bf16[2048,128], index: 3, kind: output, shape index: {}]
  %s4 = sld [smem:[#allocation0]]
  $region45: #{_matmul_nores.1} parent=0
    _
  %s6 = ssub.s32 1, %s4
  %s7 = scalar_select 0, %s6, %s4
  $region1: #{_matmul_nores.1} parent=0
    #allocation2 [shape = 'u8[65536]{0}', space=vmem, size = 0x10000, scoped, tag = 'output window, operand 0']
    #allocation3 [shape = 's32[2]{0}', space=sflag, size = 0x8, scoped, tag = 'scoped memory for _matmul_nores.1']
    %8 = vsyncpa [#allocation3], 0
    %s9 = scalar_lea.sflag [#allocation3], 1
    %10 = vsyncpa %s9, 0
    loop: start=0, step=1, limit=18
    $region2: #{_matmul_nores.1} parent=1 // loop_pre_header
      _
    $region3: #{_matmul_nores.1} parent=1 // loop_header
      %s12 = sphi 0, %s16
      %p13 = scmp.ge.s32.totalorder %s12, 18
      %s22 = sphi 0, %s24
      %s25 = sphi 0, %s22
      %s26 = sphi 0, %s25
      %s42 = sphi 0, %s26
      %s46 = sphi 0, %s46
      %s48 = sphi 0, %s46
      %s49 = sphi 0, %s48
      %s63 = sphi 0, %s49
      %s67 = sphi 0, %s67
      %s69 = sphi 0, %s67
      %s70 = sphi 0, %s69
      %s84 = sphi 0, %s70
      %s90 = sphi 0, %s92
      %s93 = sphi 0, %s90
      %s94 = sphi 0, %s93
      %s110 = sphi 0, %s94
    $region4: #{_matmul_nores.1} parent=1 // loop_header_branch
      %15 = sbr.rel (%p13) target = $region8
    $region5: #{_matmul_nores.1} parent=1 // loop_body
      %s17 = ssub.s32 %s12, 1
      %s18 = ssub.s32 %s12, 2
      %s19 = sadd.s32 %s12, 1
      %s20 = ssub.s32 %s12, %s19
      %p21 = scmp.eq.s32.totalorder %s20, 0
      %s23 = sadd.s32 %s22, 1
      %s24 = scalar_select %p21, %s22, %s23
      %p27 = pneg %p21
      %p28 = scmp.eq.s32.totalorder %s12, 15
      %p29 = por %p27, %p28
      %p30 = scmp.ne.s32.totalorder %s22, %s25
      %p31 = scmp.eq.s32.totalorder %s12, 0
      %p32 = por %p30, %p31
      %p33 = scmp.ne.s32.totalorder %s22, %s25
      %p34 = scmp.eq.s32.totalorder %s17, 15
      %p35 = por %p33, %p34
      %p36 = scmp.ne.s32.totalorder %s25, %s26
      %p37 = scmp.eq.s32.totalorder %s17, 0
      %p38 = por %p36, %p37
      %p39 = scmp.ne.s32.totalorder %s25, %s26
      %p40 = scmp.eq.s32.totalorder %s18, 15
      %p41 = por %p39, %p40
      %p43 = scmp.ne.s32.totalorder %s26, %s42
      %p44 = scmp.eq.s32.totalorder %s18, 0
      %p45 = por %p43, %p44
      %s47 = sadd.s32 %s46, 1
      %p50 = scmp.eq.s32.totalorder %s12, 15
      %p51 = scmp.ne.s32.totalorder %s46, %s48
      %p52 = scmp.eq.s32.totalorder %s12, 0
      %p53 = por %p51, %p52
      %p54 = scmp.ne.s32.totalorder %s46, %s48
      %p55 = scmp.eq.s32.totalorder %s17, 15
      %p56 = por %p54, %p55
      %p57 = scmp.ne.s32.totalorder %s48, %s49
      %p58 = scmp.eq.s32.totalorder %s17, 0
      %p59 = por %p57, %p58
      %p60 = scmp.ne.s32.totalorder %s48, %s49
      %p61 = scmp.eq.s32.totalorder %s18, 15
      %p62 = por %p60, %p61
      %p64 = scmp.ne.s32.totalorder %s49, %s63
      %p65 = scmp.eq.s32.totalorder %s18, 0
      %p66 = por %p64, %p65
      %s68 = sadd.s32 %s67, 1
      %p71 = scmp.eq.s32.totalorder %s12, 15
      %p72 = scmp.ne.s32.totalorder %s67, %s69
      %p73 = scmp.eq.s32.totalorder %s12, 0
      %p74 = por %p72, %p73
      %p75 = scmp.ne.s32.totalorder %s67, %s69
      %p76 = scmp.eq.s32.totalorder %s17, 15
      %p77 = por %p75, %p76
      %p78 = scmp.ne.s32.totalorder %s69, %s70
      %p79 = scmp.eq.s32.totalorder %s17, 0
      %p80 = por %p78, %p79
      %p81 = scmp.ne.s32.totalorder %s69, %s70
      %p82 = scmp.eq.s32.totalorder %s18, 15
      %p83 = por %p81, %p82
      %p85 = scmp.ne.s32.totalorder %s70, %s84
      %p86 = scmp.eq.s32.totalorder %s18, 0
      %p87 = por %p85, %p86
      %s88 = ssub.s32 %s12, %s19
      %p89 = scmp.eq.s32.totalorder %s88, 0
      %s91 = sadd.s32 %s90, 1
      %s92 = scalar_select %p89, %s90, %s91
      %p95 = pneg %p89
      %p96 = scmp.eq.s32.totalorder %s12, 15
      %p97 = por %p95, %p96
      %p98 = scmp.ne.s32.totalorder %s90, %s93
      %p99 = scmp.eq.s32.totalorder %s12, 0
      %p100 = por %p98, %p99
      %p101 = scmp.ne.s32.totalorder %s90, %s93
      %p102 = scmp.eq.s32.totalorder %s17, 15
      %p103 = por %p101, %p102
      %p104 = scmp.ne.s32.totalorder %s93, %s94
      %p105 = scmp.eq.s32.totalorder %s17, 0
      %p106 = por %p104, %p105
      %p107 = scmp.ne.s32.totalorder %s93, %s94
      %p108 = scmp.eq.s32.totalorder %s18, 15
      %p109 = por %p107, %p108
      %p111 = scmp.ne.s32.totalorder %s94, %s110
      %p112 = scmp.eq.s32.totalorder %s18, 0
      %p113 = por %p111, %p112
      %p114 = scmp.le.s32.totalorder 1, %s12
      %p115 = scmp.lt.s32.totalorder %s12, 17
      %p116 = pnand %p114, %p115
      %p117 = pneg %p116
      // Predicated region
      $region9: #{_matmul_nores.1} parent=5 // pred_check
        _
      $region10: #{_matmul_nores.1} parent=5 // pred_check_branch
        %119 = sbr.rel (%p116) target = $region12
      $region11: #{_matmul_nores.1} parent=5 // pred_region
        %s120 = ssub.s32 %s12, 1
        // Predicated region
        $region13: #{_matmul_nores.1} parent=11 // pred_check
          %p121 = pneg %p59
        $region14: #{_matmul_nores.1} parent=11 // pred_check_branch
          %123 = sbr.rel (%p121) target = $region16
        $region15: #{_matmul_nores.1} parent=11 // pred_region
          _
        $region16: #{_matmul_nores.1} parent=11 // pred_fallthru
          _
        // Predicated region
        $region17: #{_matmul_nores.1} parent=11 // pred_check
          %p124 = pneg %p80
        $region18: #{_matmul_nores.1} parent=11 // pred_check_branch
          %126 = sbr.rel (%p124) target = $region20
        $region19: #{_matmul_nores.1} parent=11 // pred_region
          _
        $region20: #{_matmul_nores.1} parent=11 // pred_fallthru
          _
      $region12: #{_matmul_nores.1} parent=5 // pred_fallthru
        _
      %p127 = scmp.lt.s32.totalorder %s12, 16
      // Predicated region
      $region21: #{_matmul_nores.1} parent=5 // pred_check
        %p128 = pneg %p127
      $region22: #{_matmul_nores.1} parent=5 // pred_check_branch
        %130 = sbr.rel (%p128) target = $region24
      $region23: #{_matmul_nores.1} parent=5 // pred_region
        // Predicated region
        $region25: #{_matmul_nores.1} parent=23 // pred_check
          %p131 = pneg %p32
        $region26: #{_matmul_nores.1} parent=23 // pred_check_branch
          %133 = sbr.rel (%p131) target = $region28
        $region27: #{_matmul_nores.1} parent=23 // pred_region
          %s134 = smul.u32 16, %s12
          %p135 = scmp.lt.s32.totalorder %s134, 255
          %s136 = scalar_select %p135, %s134, 255
          %s137 = smul.addr %s136, 2
          %s138 = smul.addr %s137, 4
          %s139 = scalar_lea.vmem %s0, %s138
          %s140 = smul.u32 16, %s12
        $region28: #{_matmul_nores.1} parent=23 // pred_fallthru
          _
      $region24: #{_matmul_nores.1} parent=5 // pred_fallthru
        _
      %p141 = scmp.le.s32.totalorder 1, %s12
      %p142 = scmp.lt.s32.totalorder %s12, 17
      %p143 = pnand %p141, %p142
      %p144 = pneg %p143
      // Predicated region
      $region29: #{_matmul_nores.1} parent=5 // pred_check
        _
      $region30: #{_matmul_nores.1} parent=5 // pred_check_branch
        %146 = sbr.rel (%p143) target = $region32
      $region31: #{_matmul_nores.1} parent=5 // pred_region
        %s147 = ssub.s32 %s12, 1
        %s148 = smul.u32 16, %s17
        %p149 = scmp.lt.s32.totalorder %s148, 255
        %s150 = scalar_select %p149, %s148, 255
        %s151 = smul.addr %s150, 2
        %s152 = smul.addr %s151, 4
        %s153 = scalar_lea.vmem %s0, %s152
        %p154 = pneg %p38
        %p155 = pneg %p35
        %p156 = pneg %p59
        %p157 = pneg %p56
        %p158 = pneg %p80
        %p159 = pneg %p77
        %p160 = pneg %p106
        %p161 = pneg %p103
        %s162 = sand.u32 %s93, 1
        %s163 = scalar_lea.sflag [#allocation3], %s162
        %s164 = sand.u32 %s93, 1
        %s165 = smul.addr %s164, 64
        %s166 = scalar_lea.vmem [#allocation2], %s165
        %s167 = smul.u32 16, %s17
        %p168 = scmp.lt.s32.totalorder %s167, 255
        %s169 = scalar_select %p168, %s167, 255
        %s170 = smul.addr %s169, 2
        %s171 = smul.addr %s170, 4
        %s172 = scalar_lea.vmem %s0, %s171
        %s173 = smul.u32 16, %s17
        %s174 = smul.u32 16, %s17
        %v176 = vld [vmem:[%s172] sm:$0xff]
        %v177 = vld [vmem:[%s172 + $0x8] sm:$0xff]
        %v178 = vld [vmem:[%s172 + $0x10] sm:$0xff]
        %v179 = vld [vmem:[%s172 + $0x18] sm:$0xff]
        %v180 = vld [vmem:[%s172 + $0x20] sm:$0xff]
        %v181 = vld [vmem:[%s172 + $0x28] sm:$0xff]
        %v182 = vld [vmem:[%s172 + $0x30] sm:$0xff]
        %v183 = vld [vmem:[%s172 + $0x38] sm:$0xff]
        %v184 = vld [vmem:[%s172 + $0x40] sm:$0xff]
        %v185 = vld [vmem:[%s172 + $0x48] sm:$0xff]
        %v186 = vld [vmem:[%s172 + $0x50] sm:$0xff]
        %v187 = vld [vmem:[%s172 + $0x58] sm:$0xff]
        %v188 = vld [vmem:[%s172 + $0x60] sm:$0xff]
        %v189 = vld [vmem:[%s172 + $0x68] sm:$0xff]
        %v190 = vld [vmem:[%s172 + $0x70] sm:$0xff]
        %v191 = vld [vmem:[%s172 + $0x78] sm:$0xff]
        %v192 = vld [vmem:[%s1] sm:$0xf]
        %v193 = vld [vmem:[%s1 + $0x4] sm:$0xf]
        %v194 = vld [vmem:[%s1 + $0x8] sm:$0xf]
        %v195 = vld [vmem:[%s1 + $0xc] sm:$0xf]
        %v196 = vld [vmem:[%s1 + $0x10] sm:$0xf]
        %v197 = vld [vmem:[%s1 + $0x14] sm:$0xf]
        %v198 = vld [vmem:[%s1 + $0x18] sm:$0xf]
        %v199 = vld [vmem:[%s1 + $0x1c] sm:$0xf]
        %v200 = vld [vmem:[%s1 + $0x20] sm:$0xf]
        %v201 = vld [vmem:[%s1 + $0x24] sm:$0xf]
        %v202 = vld [vmem:[%s1 + $0x28] sm:$0xf]
        %v203 = vld [vmem:[%s1 + $0x2c] sm:$0xf]
        %v204 = vld [vmem:[%s1 + $0x30] sm:$0xf]
        %v205 = vld [vmem:[%s1 + $0x34] sm:$0xf]
        %v206 = vld [vmem:[%s1 + $0x38] sm:$0xf]
        %v207 = vld [vmem:[%s1 + $0x3c] sm:$0xf]
        %v208 = vld [vmem:[%s1 + $0x40] sm:$0xf]
        %v209 = vld [vmem:[%s1 + $0x44] sm:$0xf]
        %v210 = vld [vmem:[%s1 + $0x48] sm:$0xf]
        %v211 = vld [vmem:[%s1 + $0x4c] sm:$0xf]
        %v212 = vld [vmem:[%s1 + $0x50] sm:$0xf]
        %v213 = vld [vmem:[%s1 + $0x54] sm:$0xf]
        %v214 = vld [vmem:[%s1 + $0x58] sm:$0xf]
        %v215 = vld [vmem:[%s1 + $0x5c] sm:$0xf]
        %v216 = vld [vmem:[%s1 + $0x60] sm:$0xf]
        %v217 = vld [vmem:[%s1 + $0x64] sm:$0xf]
        %v218 = vld [vmem:[%s1 + $0x68] sm:$0xf]
        %v219 = vld [vmem:[%s1 + $0x6c] sm:$0xf]
        %v220 = vld [vmem:[%s1 + $0x70] sm:$0xf]
        %v221 = vld [vmem:[%s1 + $0x74] sm:$0xf]
        %v222 = vld [vmem:[%s1 + $0x78] sm:$0xf]
        %v223 = vld [vmem:[%s1 + $0x7c] sm:$0xf]
        %v240 = vunpack.c.l.b16 %v176
        %v241 = vunpack.c.h.b16 %v176
        %v242 = vunpack.c.l.b16 %v177
        %v243 = vunpack.c.h.b16 %v177
        %v244 = vunpack.c.l.b16 %v178
        %v245 = vunpack.c.h.b16 %v178
        %v246 = vunpack.c.l.b16 %v179
        %v247 = vunpack.c.h.b16 %v179
        %v248 = vunpack.c.l.b16 %v180
        %v249 = vunpack.c.h.b16 %v180
        %v250 = vunpack.c.l.b16 %v181
        %v251 = vunpack.c.h.b16 %v181
        %v252 = vunpack.c.l.b16 %v182
        %v253 = vunpack.c.h.b16 %v182
        %v254 = vunpack.c.l.b16 %v183
        %v255 = vunpack.c.h.b16 %v183
        %v256 = vunpack.c.l.b16 %v184
        %v257 = vunpack.c.h.b16 %v184
        %v258 = vunpack.c.l.b16 %v185
        %v259 = vunpack.c.h.b16 %v185
        %v260 = vunpack.c.l.b16 %v186
        %v261 = vunpack.c.h.b16 %v186
        %v262 = vunpack.c.l.b16 %v187
        %v263 = vunpack.c.h.b16 %v187
        %v264 = vunpack.c.l.b16 %v188
        %v265 = vunpack.c.h.b16 %v188
        %v266 = vunpack.c.l.b16 %v189
        %v267 = vunpack.c.h.b16 %v189
        %v268 = vunpack.c.l.b16 %v190
        %v269 = vunpack.c.h.b16 %v190
        %v270 = vunpack.c.l.b16 %v191
        %v271 = vunpack.c.h.b16 %v191
        %v272 = vpack.c.b16 %v242, %v240
        %v273 = vpack.c.b16 %v243, %v241
        %v274 = vpack.c.b16 %v246, %v244
        %v275 = vpack.c.b16 %v247, %v245
        %v276 = vpack.c.b16 %v250, %v248
        %v277 = vpack.c.b16 %v251, %v249
        %v278 = vpack.c.b16 %v254, %v252
        %v279 = vpack.c.b16 %v255, %v253
        %v280 = vpack.c.b16 %v258, %v256
        %v281 = vpack.c.b16 %v259, %v257
        %v282 = vpack.c.b16 %v262, %v260
        %v283 = vpack.c.b16 %v263, %v261
        %v284 = vpack.c.b16 %v266, %v264
        %v285 = vpack.c.b16 %v267, %v265
        %v286 = vpack.c.b16 %v270, %v268
        %v287 = vpack.c.b16 %v271, %v269
        %v336 = vunpack.c.l.b16 %v192
        %v337 = vunpack.c.l.b16 %v193
        %v338 = vunpack.c.l.b16 %v194
        %v339 = vunpack.c.l.b16 %v195
        %v340 = vunpack.c.l.b16 %v196
        %v341 = vunpack.c.l.b16 %v197
        %v342 = vunpack.c.l.b16 %v198
        %v343 = vunpack.c.l.b16 %v199
        %v344 = vunpack.c.l.b16 %v200
        %v345 = vunpack.c.l.b16 %v201
        %v346 = vunpack.c.l.b16 %v202
        %v347 = vunpack.c.l.b16 %v203
        %v348 = vunpack.c.l.b16 %v204
        %v349 = vunpack.c.l.b16 %v205
        %v350 = vunpack.c.l.b16 %v206
        %v351 = vunpack.c.l.b16 %v207
        %v352 = vunpack.c.l.b16 %v208
        %v353 = vunpack.c.l.b16 %v209
        %v354 = vunpack.c.l.b16 %v210
        %v355 = vunpack.c.l.b16 %v211
        %v356 = vunpack.c.l.b16 %v212
        %v357 = vunpack.c.l.b16 %v213
        %v358 = vunpack.c.l.b16 %v214
        %v359 = vunpack.c.l.b16 %v215
        %v360 = vunpack.c.l.b16 %v216
        %v361 = vunpack.c.l.b16 %v217
        %v362 = vunpack.c.l.b16 %v218
        %v363 = vunpack.c.l.b16 %v219
        %v364 = vunpack.c.l.b16 %v220
        %v365 = vunpack.c.l.b16 %v221
        %v366 = vunpack.c.l.b16 %v222
        %v367 = vunpack.c.l.b16 %v223
        %v368 = vpack.c.b16 %v337, %v336
        %v369 = vpack.c.b16 %v339, %v338
        %v370 = vpack.c.b16 %v341, %v340
        %v371 = vpack.c.b16 %v343, %v342
        %v372 = vpack.c.b16 %v345, %v344
        %v373 = vpack.c.b16 %v347, %v346
        %v374 = vpack.c.b16 %v349, %v348
        %v375 = vpack.c.b16 %v351, %v350
        %v376 = vpack.c.b16 %v353, %v352
        %v377 = vpack.c.b16 %v355, %v354
        %v378 = vpack.c.b16 %v357, %v356
        %v379 = vpack.c.b16 %v359, %v358
        %v380 = vpack.c.b16 %v361, %v360
        %v381 = vpack.c.b16 %v363, %v362
        %v382 = vpack.c.b16 %v365, %v364
        %v383 = vpack.c.b16 %v367, %v366
        %400 = vmatprep.subr.bf16.mxu0 0
        %401 = vmatpush1.bf16.msra.mxu0 %v368
        %402 = vmatprep.subr.bf16.mxu0 0
        %403 = vmatpush1.bf16.msra.mxu0 %v369
        %404 = vmatprep.subr.bf16.mxu0 0
        %405 = vmatpush1.bf16.msra.mxu0 %v370
        %406 = vmatprep.subr.bf16.mxu0 0
        %407 = vmatpush1.bf16.msra.mxu0 %v371
        %408 = vmatprep.subr.bf16.mxu0 0
        %409 = vmatpush1.bf16.msra.mxu0 %v372
        %410 = vmatprep.subr.bf16.mxu0 0
        %411 = vmatpush1.bf16.msra.mxu0 %v373
        %412 = vmatprep.subr.bf16.mxu0 0
        %413 = vmatpush1.bf16.msra.mxu0 %v374
        %414 = vmatprep.subr.bf16.mxu0 0
        %415 = vmatpush1.bf16.msra.mxu0 %v375
        %416 = vmatprep.subr.bf16.mxu0 0
        %417 = vmatpush1.bf16.msra.mxu0 %v376
        %418 = vmatprep.subr.bf16.mxu0 0
        %419 = vmatpush1.bf16.msra.mxu0 %v377
        %420 = vmatprep.subr.bf16.mxu0 0
        %421 = vmatpush1.bf16.msra.mxu0 %v378
        %422 = vmatprep.subr.bf16.mxu0 0
        %423 = vmatpush1.bf16.msra.mxu0 %v379
        %424 = vmatprep.subr.bf16.mxu0 0
        %425 = vmatpush1.bf16.msra.mxu0 %v380
        %426 = vmatprep.subr.bf16.mxu0 0
        %427 = vmatpush1.bf16.msra.mxu0 %v381
        %428 = vmatprep.subr.bf16.mxu0 0
        %429 = vmatpush1.bf16.msra.mxu0 %v382
        %430 = vmatprep.subr.bf16.mxu0 0
        %431 = vmatpush1.bf16.msra.mxu0 %v383
        %432 = vmatprep.mubr.bf16.mxu0 %v273
        %433 = vmatmul.mubr.bf16.gmra.mrb[0].mxu0 %v272
        %v434 = vpop.f32.mrb[0].mxu0
        %v435 = vadd.f32 0.0, %v434
        %v436 = vpop.f32.mrb[0].mxu0
        %v437 = vpop.f32.mrb[0].mxu0
        %v438 = vadd.f32 0.0, %v437
        %v439 = vpop.f32.mrb[0].mxu0
        %440 = vmatprep.mubr.bf16.mxu0 %v275
        %441 = vmatmul.mubr.bf16.gmra.mrb[0].mxu0 %v274
        %v442 = vpop.f32.mrb[0].mxu0
        %v443 = vadd.f32 0.0, %v442
        %v444 = vpop.f32.mrb[0].mxu0
        %v445 = vpop.f32.mrb[0].mxu0
        %v446 = vadd.f32 0.0, %v445
        %v447 = vpop.f32.mrb[0].mxu0
        %448 = vmatprep.mubr.bf16.mxu0 %v277
        %449 = vmatmul.mubr.bf16.gmra.mrb[0].mxu0 %v276
        %v450 = vpop.f32.mrb[0].mxu0
        %v451 = vadd.f32 0.0, %v450
        %v452 = vpop.f32.mrb[0].mxu0
        %v453 = vpop.f32.mrb[0].mxu0
        %v454 = vadd.f32 0.0, %v453
        %v455 = vpop.f32.mrb[0].mxu0
        %456 = vmatprep.mubr.bf16.mxu0 %v279
        %457 = vmatmul.mubr.bf16.gmra.mrb[0].mxu0 %v278
        %v458 = vpop.f32.mrb[0].mxu0
        %v459 = vadd.f32 0.0, %v458
        %v460 = vpop.f32.mrb[0].mxu0
        %v461 = vpop.f32.mrb[0].mxu0
        %v462 = vadd.f32 0.0, %v461
        %v463 = vpop.f32.mrb[0].mxu0
        %464 = vmatprep.mubr.bf16.mxu0 %v281
        %465 = vmatmul.mubr.bf16.gmra.mrb[0].mxu0 %v280
        %v466 = vpop.f32.mrb[0].mxu0
        %v467 = vadd.f32 0.0, %v466
        %v468 = vpop.f32.mrb[0].mxu0
        %v469 = vpop.f32.mrb[0].mxu0
        %v470 = vadd.f32 0.0, %v469
        %v471 = vpop.f32.mrb[0].mxu0
        %472 = vmatprep.mubr.bf16.mxu0 %v283
        %473 = vmatmul.mubr.bf16.gmra.mrb[0].mxu0 %v282
        %v474 = vpop.f32.mrb[0].mxu0
        %v475 = vadd.f32 0.0, %v474
        %v476 = vpop.f32.mrb[0].mxu0
        %v477 = vpop.f32.mrb[0].mxu0
        %v478 = vadd.f32 0.0, %v477
        %v479 = vpop.f32.mrb[0].mxu0
        %480 = vmatprep.mubr.bf16.mxu0 %v285
        %481 = vmatmul.mubr.bf16.gmra.mrb[0].mxu0 %v284
        %v482 = vpop.f32.mrb[0].mxu0
        %v483 = vadd.f32 0.0, %v482
        %v484 = vpop.f32.mrb[0].mxu0
        %v485 = vpop.f32.mrb[0].mxu0
        %v486 = vadd.f32 0.0, %v485
        %v487 = vpop.f32.mrb[0].mxu0
        %488 = vmatprep.mubr.bf16.mxu0 %v287
        %489 = vmatmul.mubr.bf16.gmra.mrb[0].mxu0 %v286
        %v490 = vpop.f32.mrb[0].mxu0
        %v491 = vadd.f32 0.0, %v490
        %v492 = vpop.f32.mrb[0].mxu0
        %v493 = vpop.f32.mrb[0].mxu0
        %v494 = vadd.f32 0.0, %v493
        %v495 = vpop.f32.mrb[0].mxu0
        %496 = vdwg.mxu0
        %v497 = vld [vmem:[%s2] sm:$0x3]
        %v498 = vlaneseq
        %v499 = vshrl.u32 %v498, 7
        %v500 = vsub.s32 0, %v499
        %v501 = vrot.slane %v497, %v500
        %v502 = vmul.f32 %v435, %v501
        %v503 = vmul.f32 %v438, %v501
        %v504 = vmul.f32 %v443, %v501
        %v505 = vmul.f32 %v446, %v501
        %v506 = vmul.f32 %v451, %v501
        %v507 = vmul.f32 %v454, %v501
        %v508 = vmul.f32 %v459, %v501
        %v509 = vmul.f32 %v462, %v501
        %v510 = vmul.f32 %v467, %v501
        %v511 = vmul.f32 %v470, %v501
        %v512 = vmul.f32 %v475, %v501
        %v513 = vmul.f32 %v478, %v501
        %v514 = vmul.f32 %v483, %v501
        %v515 = vmul.f32 %v486, %v501
        %v516 = vmul.f32 %v491, %v501
        %v517 = vmul.f32 %v494, %v501
        %v518 = vlaneseq
        %v519 = vshrl.u32 %v518, 7
        %v520 = vsub.s32 1, %v519
        %v521 = vrot.slane %v497, %v520
        %v522 = vadd.f32 %v502, %v521
        %v523 = vadd.f32 %v503, %v521
        %v524 = vadd.f32 %v504, %v521
        %v525 = vadd.f32 %v505, %v521
        %v526 = vadd.f32 %v506, %v521
        %v527 = vadd.f32 %v507, %v521
        %v528 = vadd.f32 %v508, %v521
        %v529 = vadd.f32 %v509, %v521
        %v530 = vadd.f32 %v510, %v521
        %v531 = vadd.f32 %v511, %v521
        %v532 = vadd.f32 %v512, %v521
        %v533 = vadd.f32 %v513, %v521
        %v534 = vadd.f32 %v514, %v521
        %v535 = vadd.f32 %v515, %v521
        %v536 = vadd.f32 %v516, %v521
        %v537 = vadd.f32 %v517, %v521
        %v538 = vmax.f32 %v522, 0.0
        %v539 = vmax.f32 %v523, 0.0
        %v540 = vmax.f32 %v524, 0.0
        %v541 = vmax.f32 %v525, 0.0
        %v542 = vmax.f32 %v526, 0.0
        %v543 = vmax.f32 %v527, 0.0
        %v544 = vmax.f32 %v528, 0.0
        %v545 = vmax.f32 %v529, 0.0
        %v546 = vmax.f32 %v530, 0.0
        %v547 = vmax.f32 %v531, 0.0
        %v548 = vmax.f32 %v532, 0.0
        %v549 = vmax.f32 %v533, 0.0
        %v550 = vmax.f32 %v534, 0.0
        %v551 = vmax.f32 %v535, 0.0
        %v552 = vmax.f32 %v536, 0.0
        %v553 = vmax.f32 %v537, 0.0
        %v554 = vpack.c.bf16 %v539, %v538
        %v555 = vpack.c.bf16 %v541, %v540
        %v556 = vpack.c.bf16 %v543, %v542
        %v557 = vpack.c.bf16 %v545, %v544
        %v558 = vpack.c.bf16 %v547, %v546
        %v559 = vpack.c.bf16 %v549, %v548
        %v560 = vpack.c.bf16 %v551, %v550
        %v561 = vpack.c.bf16 %v553, %v552
        %v570 = vunpack.c.l.b16 %v554
        %v571 = vunpack.c.h.b16 %v554
        %v572 = vunpack.c.l.b16 %v555
        %v573 = vunpack.c.h.b16 %v555
        %v574 = vunpack.c.l.b16 %v556
        %v575 = vunpack.c.h.b16 %v556
        %v576 = vunpack.c.l.b16 %v557
        %v577 = vunpack.c.h.b16 %v557
        %v578 = vunpack.c.l.b16 %v558
        %v579 = vunpack.c.h.b16 %v558
        %v580 = vunpack.c.l.b16 %v559
        %v581 = vunpack.c.h.b16 %v559
        %v582 = vunpack.c.l.b16 %v560
        %v583 = vunpack.c.h.b16 %v560
        %v584 = vunpack.c.l.b16 %v561
        %v585 = vunpack.c.h.b16 %v561
        %v586 = vpack.c.b16 %v570, %v570
        %v587 = vpack.c.b16 %v571, %v571
        %v588 = vpack.c.b16 %v572, %v572
        %v589 = vpack.c.b16 %v573, %v573
        %v590 = vpack.c.b16 %v574, %v574
        %v591 = vpack.c.b16 %v575, %v575
        %v592 = vpack.c.b16 %v576, %v576
        %v593 = vpack.c.b16 %v577, %v577
        %v594 = vpack.c.b16 %v578, %v578
        %v595 = vpack.c.b16 %v579, %v579
        %v596 = vpack.c.b16 %v580, %v580
        %v597 = vpack.c.b16 %v581, %v581
        %v598 = vpack.c.b16 %v582, %v582
        %v599 = vpack.c.b16 %v583, %v583
        %v600 = vpack.c.b16 %v584, %v584
        %v601 = vpack.c.b16 %v585, %v585
        %618 = vst [vmem:[%s166] sm:$0xf] %v586
        %619 = vst [vmem:[%s166 + $0x4] sm:$0xf] %v587
        %620 = vst [vmem:[%s166 + $0x8] sm:$0xf] %v588
        %621 = vst [vmem:[%s166 + $0xc] sm:$0xf] %v589
        %622 = vst [vmem:[%s166 + $0x10] sm:$0xf] %v590
        %623 = vst [vmem:[%s166 + $0x14] sm:$0xf] %v591
        %624 = vst [vmem:[%s166 + $0x18] sm:$0xf] %v592
        %625 = vst [vmem:[%s166 + $0x1c] sm:$0xf] %v593
        %626 = vst [vmem:[%s166 + $0x20] sm:$0xf] %v594
        %627 = vst [vmem:[%s166 + $0x24] sm:$0xf] %v595
        %628 = vst [vmem:[%s166 + $0x28] sm:$0xf] %v596
        %629 = vst [vmem:[%s166 + $0x2c] sm:$0xf] %v597
        %630 = vst [vmem:[%s166 + $0x30] sm:$0xf] %v598
        %631 = vst [vmem:[%s166 + $0x34] sm:$0xf] %v599
        %632 = vst [vmem:[%s166 + $0x38] sm:$0xf] %v600
        %633 = vst [vmem:[%s166 + $0x3c] sm:$0xf] %v601
        %s634 = sand.u32 %s93, 1
        %s635 = scalar_lea.sflag [#allocation3], %s634
        %s636 = sand.u32 %s93, 1
        %s637 = smul.addr %s636, 64
        %s638 = scalar_lea.vmem [#allocation2], %s637
        // Predicated region
        $region33: #{_matmul_nores.1} parent=31 // pred_check
          %p639 = pneg %p103
        $region34: #{_matmul_nores.1} parent=31 // pred_check_branch
          %641 = sbr.rel (%p639) target = $region36
        $region35: #{_matmul_nores.1} parent=31 // pred_region
          %s642 = smul.u32 16, %s17
          %s644 = ssub.s32 1024, 1024
          %645 = vsyncadd %s635, %s644
          %s646 = smul.addr %s642, 64
          %s647 = scalar_lea.hbm %s3, %s646
          %s648 = sshll.u32 %s638, 4
          %s649 = int_to_ptr.vmem [resolvable:$true] %s648
          %654 = dma.vmem_to_hbm [thread:$0]  %s649, 1024, %s647, %s635, 64, 64, 4
        $region36: #{_matmul_nores.1} parent=31 // pred_fallthru
          _
      $region32: #{_matmul_nores.1} parent=5 // pred_fallthru
        _
      %p655 = scmp.le.s32.totalorder 2, %s12
      // Predicated region
      $region37: #{_matmul_nores.1} parent=5 // pred_check
        %p656 = pneg %p655
      $region38: #{_matmul_nores.1} parent=5 // pred_check_branch
        %658 = sbr.rel (%p656) target = $region40
      $region39: #{_matmul_nores.1} parent=5 // pred_region
        %s659 = ssub.s32 %s12, 2
        // Predicated region
        $region41: #{_matmul_nores.1} parent=39 // pred_check
          %p660 = pneg %p109
        $region42: #{_matmul_nores.1} parent=39 // pred_check_branch
          %662 = sbr.rel (%p660) target = $region44
        $region43: #{_matmul_nores.1} parent=39 // pred_region
          %s663 = sand.u32 %s94, 1
          %s664 = scalar_lea.sflag [#allocation3], %s663
          %s665 = sand.u32 %s94, 1
          %s666 = smul.addr %s665, 64
          %s667 = scalar_lea.vmem [#allocation2], %s666
          %668 = dma.done %s664, 1024
        $region44: #{_matmul_nores.1} parent=39 // pred_fallthru
          _
      $region40: #{_matmul_nores.1} parent=5 // pred_fallthru
        _
    $region6: #{_matmul_nores.1} parent=1 // loop_footer
      %s16 = sadd.s32 1, %s12
    $region7: #{_matmul_nores.1} parent=1 // loop_footer_branch
      %11 = sbr.rel target = $region3
    $region8: #{_matmul_nores.1} parent=1 // loop_exit
      _
    %669 = vsyncpa [#allocation3], 1
    %s670 = scalar_lea.sflag [#allocation3], 1
    %671 = vsyncpa %s670, 1

</llo_original>
